<compile_context>
chip_gen: v5e
topology: v5e:2x2
jax: 0.10.0
libtpu: 0.0.40
codegen_flags: <defaults>
</compile_context>

<pallas_src>
import functools

import jax
import jax.numpy as jnp
from jax.experimental import pallas as pl
from jax.experimental.pallas import tpu as pltpu


def _mlstn_partials_kernel(p0_ref, pf_ref, p3_ref, gts_ref, imgs_ref,
                           reg_ref, mse3_ref, sim_ref, *, nloop):
    """Raw sums of squared error for one (batch, hw-tile) grid point.

    Blocks (batch dim squeezed by the BlockSpec `None`):
      p0_ref:   (nloop, TILE)       channel-0 preds for the sliding-window loop
      pf_ref:   (3, TILE)           last-step 3-channel preds
      p3_ref:   (nloop, TILE)       preds_t3
      gts_ref:  (T, TILE)
      imgs_ref: (3*(T-2), TILE)     imgs frames 2..T-1, channel folded into rows
    Outputs (tiny per-tile partials, reduced / scaled in the JAX wrapper):
      reg_ref:  (1, 1)              SSE of both reg terms
      mse3_ref: (nloop, 1)          per-step SSE(preds_t3[i], gts[i+3])
      sim_ref:  (3*nloop, 1)        per-(step, channel) SSE(imgs[i+2], imgs[i+3])
    """
    T = nloop + 3

    # Sliding-window reg term (channel-0 preds vs gts[0:T-3]) plus the final
    # 3-channel term (last-step preds vs gts[T-3:T]) -- two slab SSEs.
    d0 = p0_ref[...] - gts_ref[0:nloop, :]
    dfin = pf_ref[...] - gts_ref[nloop:T, :]
    reg_rows = jnp.sum(d0 * d0, axis=-1, keepdims=True)          # (nloop, 1)
    fin_rows = jnp.sum(dfin * dfin, axis=-1, keepdims=True)      # (3, 1)
    reg_ref[...] = (jnp.sum(reg_rows, axis=0, keepdims=True)
                    + jnp.sum(fin_rows, axis=0, keepdims=True))  # (1, 1)

    # Per-step SSE of preds_t3 vs gts[i+3] (lst-term numerator).
    d3 = p3_ref[...] - gts_ref[3:T, :]
    mse3_ref[...] = jnp.sum(d3 * d3, axis=-1, keepdims=True)     # (nloop, 1)

    # Per-(step, channel) SSE of adjacent image frames.  Row 3*i+c of the
    # imgs block is frame i+2 / channel c, so the adjacent-frame diff is a
    # single slab shifted by 3 rows.
    dimg = imgs_ref[0:3 * nloop, :] - imgs_ref[3:3 * nloop + 3, :]
    sim_ref[...] = jnp.sum(dimg * dimg, axis=-1, keepdims=True)  # (3*nloop, 1)


def _round_up(x, m):
    return (x + m - 1) // m * m


def _tile_and_vmem(hw, T):
    """Generation-aware HW tile (lanes) and scoped-VMEM request."""
    try:
        kind = jax.devices()[0].device_kind.lower()
    except Exception:  # pragma: no cover
        kind = ""
    if "v7" in kind:                                # 64 MiB VMEM, ~3.2 TB/s
        lane_cap, vmem_limit = 49152, 46 * 1024 * 1024
    elif "v6" in kind:                              # 128 MiB VMEM, ~1.4 TB/s
        lane_cap, vmem_limit = 32768, 30 * 1024 * 1024
    elif "v5 lite" in kind or "v5e" in kind:        # 16 MiB scoped default
        lane_cap, vmem_limit = 16384, 20 * 1024 * 1024
    else:                                           # conservative everywhere
        lane_cap, vmem_limit = 16384, 24 * 1024 * 1024

    nloop = T - 3
    pad8 = lambda r: _round_up(r, 8)                # (8,128) sublane padding
    rows = pad8(nloop) + pad8(3) + pad8(nloop) + pad8(T) + pad8(3 * (T - 2))
    per_lane = 2 * rows * 4                         # double-buffered f32 bytes
    # Keep pipelined input blocks under ~half the scoped limit; the rest is
    # headroom for elementwise temporaries and compiler scratch.
    max_lanes = max(128, (vmem_limit // 2) // per_lane // 128 * 128)
    tile = min(lane_cap, max_lanes, _round_up(hw, 128))
    return int(tile), int(vmem_limit)


def mlstn_loss_pallas(preds_t012, preds_t3, gts, imgs, lamda=0.001, beta=30.0,
                      tile_hw=None):
    B, T, H, W = gts.shape
    assert T >= 4, "need T >= 4 (T == 3 divides the lst term by zero, as in reference)"
    HW = H * W
    nloop = T - 3
    f32 = jnp.float32

    # Lane-dense, dead-data-free views.  Only channel 0 of the first T-3 steps
    # of preds_t012, the last step's 3 channels, the first T-3 steps of
    # preds_t3 and imgs frames 2..T-1 are ever read.  imgs' channel axis is
    # folded into the row axis so it does not pad 3 -> 8 sublanes in VMEM.
    p0 = preds_t012[:, :nloop, 0, 0].reshape(B, nloop, HW).astype(f32)
    pf = preds_t012[:, -1, :, 0].reshape(B, 3, HW).astype(f32)
    p3 = preds_t3[:, :nloop, 0].reshape(B, nloop, HW).astype(f32)
    g = gts.reshape(B, T, HW).astype(f32)
    im = imgs[:, 2:].reshape(B, 3 * (T - 2), HW).astype(f32)

    auto_tile, vmem_limit = _tile_and_vmem(HW, T)
    tile = auto_tile if tile_hw is None else int(tile_hw)
    assert tile % 128 == 0, tile

    # Pad HW up to a multiple of the tile.  All operands get identical zero
    # padding, so every padded squared-difference is exactly 0; the true H*W
    # is still used for all means in the glue below.
    HW_pad = _round_up(HW, tile)
    if HW_pad != HW:
        pad = ((0, 0), (0, 0), (0, HW_pad - HW))
        p0, pf, p3, g, im = (jnp.pad(a, pad) for a in (p0, pf, p3, g, im))
    n_hw = HW_pad // tile

    kernel = functools.partial(_mlstn_partials_kernel, nloop=nloop)

    in_rows = nloop + 3 + nloop + T + 3 * (T - 2)
    cost = pl.CostEstimate(
        flops=3 * B * HW_pad * (5 * nloop + 3),
        transcendentals=0,
        bytes_accessed=4 * B * HW_pad * in_rows + 4 * B * n_hw * (1 + 4 * nloop))

    reg_p, mse3_p, sim_p = pl.pallas_call(
        kernel,
        out_shape=(
            jax.ShapeDtypeStruct((B, n_hw, 1, 1), f32),
            jax.ShapeDtypeStruct((B, n_hw, nloop, 1), f32),
            jax.ShapeDtypeStruct((B, n_hw, 3 * nloop, 1), f32),
        ),
        grid=(B, n_hw),
        in_specs=[
            pl.BlockSpec((None, nloop, tile), lambda b, h: (b, 0, h)),
            pl.BlockSpec((None, 3, tile), lambda b, h: (b, 0, h)),
            pl.BlockSpec((None, nloop, tile), lambda b, h: (b, 0, h)),
            pl.BlockSpec((None, T, tile), lambda b, h: (b, 0, h)),
            pl.BlockSpec((None, 3 * (T - 2), tile), lambda b, h: (b, 0, h)),
        ],
        out_specs=(
            pl.BlockSpec((None, None, 1, 1), lambda b, h: (b, h, 0, 0)),
            pl.BlockSpec((None, None, nloop, 1), lambda b, h: (b, h, 0, 0)),
            pl.BlockSpec((None, None, 3 * nloop, 1), lambda b, h: (b, h, 0, 0)),
        ),
        compiler_params=pltpu.CompilerParams(
            dimension_semantics=("parallel", "parallel"),
            vmem_limit_bytes=vmem_limit),
        cost_estimate=cost,
    )(p0, pf, p3, g, im)

    # ---- negligible JAX glue: tile reduction, scaling, exp, combine ----
    inv_hw = 1.0 / float(HW)
    reg = jnp.sum(reg_p, axis=(1, 2, 3)) * inv_hw                     # (B,)
    mse3 = jnp.sum(mse3_p, axis=(1, 3)) * inv_hw                      # (B, nloop)
    sim_sse = jnp.sum(sim_p, axis=(1, 3)).reshape(B, nloop, 3).sum(-1)
    sim = jnp.exp(-(sim_sse * inv_hw / 3.0) / (2.0 * float(beta) ** 2))
    lst = jnp.sum(sim * mse3, axis=-1)                                # (B,)
    loss = reg / (2.0 * T) + float(lamda) * (lst / (2.0 * T - 6.0))
    return jnp.mean(loss)


def mlstn_loss_ref(preds_t012, preds_t3, gts, imgs, lamda=0.001, beta=30.0):
    """Pure-JAX reference mirroring the PyTorch code exactly."""
    B, T, H, W = gts.shape
    reg = jnp.zeros((B,), jnp.float32)
    lst = jnp.zeros((B,), jnp.float32)
    for i in range(T - 3):
        pred_t0 = preds_t012[:, i, 0, 0]                       # (B, H, W)
        reg += jnp.mean((pred_t0 - gts[:, i]) ** 2, axis=(-1, -2))
        pred_t3 = preds_t3[:, i, 0]                            # (B, H, W)
        mse_t3 = jnp.mean((pred_t3 - gts[:, i + 3]) ** 2, axis=(-1, -2))
        sim = jnp.mean((imgs[:, i + 2] - imgs[:, i + 3]) ** 2,
                       axis=(-1, -2)).mean(axis=1)
        sim = jnp.exp(-sim / (2 * beta * beta))
        lst += sim * mse_t3
    final = jnp.mean((preds_t012[:, -1, :, 0] - gts[:, T - 3:T]) ** 2,
                     axis=(-1, -2)).sum(axis=1)
    reg += final
    reg = reg / (2 * T)
    lst = lst / (2 * T - 6)
    return jnp.mean(reg + lamda * lst)


class MLSTNLossPallas:
    """JAX/Pallas equivalent of the PyTorch MLSTN_Loss module (no parameters)."""

    def __init__(self, lamda=0.001, beta=30.0):
        self.lamda = lamda
        self.beta = beta

    def __call__(self, preds_t012, preds_t3, gts, imgs):
        return mlstn_loss_pallas(preds_t012, preds_t3, gts, imgs,
                                 self.lamda, self.beta)


if __name__ == "__main__":
    def make_inputs(key, B, T, H, W):
        k1, k2, k3, k4 = jax.random.split(key, 4)
        preds_t012 = jax.random.normal(k1, (B, T - 2, 3, 1, H, W), jnp.float32)
        preds_t3 = jax.random.normal(k2, (B, T - 2, 1, H, W), jnp.float32)
        gts = jax.random.normal(k3, (B, T, H, W), jnp.float32)
        imgs = jax.random.normal(k4, (B, T, 3, H, W), jnp.float32)
        return preds_t012, preds_t3, gts, imgs

    key0, key1 = jax.random.split(jax.random.PRNGKey(0))

    # main config
    B, T, H, W = 2, 8, 16, 16
    a1, a2, a3, a4 = make_inputs(key0, B, T, H, W)
    ref = jax.block_until_ready(mlstn_loss_ref(a1, a2, a3, a4, 0.001, 30.0))

    loss_mod = MLSTNLossPallas(lamda=0.001, beta=30.0)
    out = jax.block_until_ready(loss_mod(a1, a2, a3, a4))
    assert out.shape == (), f"expected scalar, got {out.shape}"
    assert jnp.allclose(out, ref, rtol=1e-5, atol=1e-6), (out, ref)

    # forced multi-tile path (exercises the cross-tile partial reduction)
    out_tiled = jax.block_until_ready(
        mlstn_loss_pallas(a1, a2, a3, a4, 0.001, 30.0, tile_hw=128))
    assert jnp.allclose(out_tiled, ref, rtol=1e-5, atol=1e-6), (out_tiled, ref)

    # awkward H*W (not a multiple of 128) -> exercises the zero-pad path
    b1, b2, b3, b4 = make_inputs(key1, 1, 6, 10, 10)
    ref2 = jax.block_until_ready(mlstn_loss_ref(b1, b2, b3, b4, 0.001, 30.0))
    out2 = jax.block_until_ready(mlstn_loss_pallas(b1, b2, b3, b4, 0.001, 30.0))
    assert jnp.allclose(out2, ref2, rtol=1e-5, atol=1e-6), (out2, ref2)

    print("KERNEL_OK")
</pallas_src>

<mosaic_0001>
module attributes {stable_mosaic.version = 11 : i64} {
  func.func @_mlstn_partials_kernel(%arg0: i32, %arg1: i32, %arg2: memref<1x5x256xf32, #tpu.memory_space<vmem>>, %arg3: memref<1x3x256xf32, #tpu.memory_space<vmem>>, %arg4: memref<1x5x256xf32, #tpu.memory_space<vmem>>, %arg5: memref<1x8x256xf32, #tpu.memory_space<vmem>>, %arg6: memref<1x18x256xf32, #tpu.memory_space<vmem>>, %arg7: memref<1x1x1x1xf32, #tpu.memory_space<vmem>>, %arg8: memref<1x1x5x1xf32, #tpu.memory_space<vmem>>, %arg9: memref<1x1x15x1xf32, #tpu.memory_space<vmem>>) attributes {dimension_semantics = [#tpu.dimension_semantics<parallel>, #tpu.dimension_semantics<parallel>], iteration_bounds = array<i64: 2, 1>, scalar_prefetch = 0 : i64, scratch_operands = 0 : i64, tpu.core_type = #tpu.core_type<tc>, window_params = [{transform_indices = @transform_0, window_bounds = array<i64: 1, 5, 256>}, {transform_indices = @transform_1, window_bounds = array<i64: 1, 3, 256>}, {transform_indices = @transform_2, window_bounds = array<i64: 1, 5, 256>}, {transform_indices = @transform_3, window_bounds = array<i64: 1, 8, 256>}, {transform_indices = @transform_4, window_bounds = array<i64: 1, 18, 256>}, {transform_indices = @transform_5, window_bounds = array<i64: 1, 1, 1, 1>}, {transform_indices = @transform_6, window_bounds = array<i64: 1, 1, 5, 1>}, {transform_indices = @transform_7, window_bounds = array<i64: 1, 1, 15, 1>}]} {
    %c0 = arith.constant 0 : index
    %c0_0 = arith.constant 0 : index
    %c0_1 = arith.constant 0 : index
    %0 = vector.load %arg2[%c0, %c0_0, %c0_1] : memref<1x5x256xf32, #tpu.memory_space<vmem>>, vector<1x5x256xf32>
    %1 = vector.shape_cast %0 : vector<1x5x256xf32> to vector<5x256xf32>
    %c0_2 = arith.constant 0 : index
    %c0_3 = arith.constant 0 : index
    %c0_4 = arith.constant 0 : index
    %2 = vector.load %arg5[%c0_2, %c0_3, %c0_4] : memref<1x8x256xf32, #tpu.memory_space<vmem>>, vector<1x5x256xf32>
    %3 = vector.shape_cast %2 : vector<1x5x256xf32> to vector<5x256xf32>
    %4 = arith.subf %1, %3 : vector<5x256xf32>
    %c0_5 = arith.constant 0 : index
    %c0_6 = arith.constant 0 : index
    %c0_7 = arith.constant 0 : index
    %5 = vector.load %arg3[%c0_5, %c0_6, %c0_7] : memref<1x3x256xf32, #tpu.memory_space<vmem>>, vector<1x3x256xf32>
    %6 = vector.shape_cast %5 : vector<1x3x256xf32> to vector<3x256xf32>
    %c0_8 = arith.constant 0 : index
    %c5 = arith.constant 5 : index
    %c0_9 = arith.constant 0 : index
    %7 = vector.load %arg5[%c0_8, %c5, %c0_9] : memref<1x8x256xf32, #tpu.memory_space<vmem>>, vector<1x3x256xf32>
    %8 = vector.shape_cast %7 : vector<1x3x256xf32> to vector<3x256xf32>
    %9 = arith.subf %6, %8 : vector<3x256xf32>
    %10 = arith.mulf %4, %4 : vector<5x256xf32>
    %cst = arith.constant dense<0.000000e+00> : vector<5xf32>
    %11 = vector.multi_reduction <add>, %10, %cst [1] : vector<5x256xf32> to vector<5xf32>
    %12 = vector.shape_cast %11 : vector<5xf32> to vector<5x1xf32>
    %13 = arith.mulf %9, %9 : vector<3x256xf32>
    %cst_10 = arith.constant dense<0.000000e+00> : vector<3xf32>
    %14 = vector.multi_reduction <add>, %13, %cst_10 [1] : vector<3x256xf32> to vector<3xf32>
    %15 = vector.shape_cast %14 : vector<3xf32> to vector<3x1xf32>
    %cst_11 = arith.constant dense<0.000000e+00> : vector<1xf32>
    %16 = vector.multi_reduction <add>, %12, %cst_11 [0] : vector<5x1xf32> to vector<1xf32>
    %17 = vector.shape_cast %16 : vector<1xf32> to vector<1x1xf32>
    %cst_12 = arith.constant dense<0.000000e+00> : vector<1xf32>
    %18 = vector.multi_reduction <add>, %15, %cst_12 [0] : vector<3x1xf32> to vector<1xf32>
    %19 = vector.shape_cast %18 : vector<1xf32> to vector<1x1xf32>
    %20 = arith.addf %17, %19 : vector<1x1xf32>
    %c0_13 = arith.constant 0 : index
    %c0_14 = arith.constant 0 : index
    %c0_15 = arith.constant 0 : index
    %c0_16 = arith.constant 0 : index
    %21 = vector.load %arg7[%c0_13, %c0_14, %c0_15, %c0_16] : memref<1x1x1x1xf32, #tpu.memory_space<vmem>>, vector<1x1x1x1xf32>
    %22 = vector.shape_cast %21 : vector<1x1x1x1xf32> to vector<1x1xf32>
    %23 = vector.shape_cast %20 : vector<1x1xf32> to vector<1x1x1x1xf32>
    tpu.vector_store %arg7[%c0_13, %c0_14, %c0_15, %c0_16], %23 {strides = array<i32>} : memref<1x1x1x1xf32, #tpu.memory_space<vmem>>, vector<1x1x1x1xf32>,
    %c0_17 = arith.constant 0 : index
    %c0_18 = arith.constant 0 : index
    %c0_19 = arith.constant 0 : index
    %24 = vector.load %arg4[%c0_17, %c0_18, %c0_19] : memref<1x5x256xf32, #tpu.memory_space<vmem>>, vector<1x5x256xf32>
    %25 = vector.shape_cast %24 : vector<1x5x256xf32> to vector<5x256xf32>
    %c0_20 = arith.constant 0 : index
    %c3 = arith.constant 3 : index
    %c0_21 = arith.constant 0 : index
    %26 = vector.load %arg5[%c0_20, %c3, %c0_21] : memref<1x8x256xf32, #tpu.memory_space<vmem>>, vector<1x5x256xf32>
    %27 = vector.shape_cast %26 : vector<1x5x256xf32> to vector<5x256xf32>
    %28 = arith.subf %25, %27 : vector<5x256xf32>
    %29 = arith.mulf %28, %28 : vector<5x256xf32>
    %cst_22 = arith.constant dense<0.000000e+00> : vector<5xf32>
    %30 = vector.multi_reduction <add>, %29, %cst_22 [1] : vector<5x256xf32> to vector<5xf32>
    %31 = vector.shape_cast %30 : vector<5xf32> to vector<5x1xf32>
    %c0_23 = arith.constant 0 : index
    %c0_24 = arith.constant 0 : index
    %c0_25 = arith.constant 0 : index
    %c0_26 = arith.constant 0 : index
    %32 = vector.load %arg8[%c0_23, %c0_24, %c0_25, %c0_26] : memref<1x1x5x1xf32, #tpu.memory_space<vmem>>, vector<1x1x5x1xf32>
    %33 = vector.shape_cast %32 : vector<1x1x5x1xf32> to vector<5x1xf32>
    %34 = vector.shape_cast %31 : vector<5x1xf32> to vector<1x1x5x1xf32>
    tpu.vector_store %arg8[%c0_23, %c0_24, %c0_25, %c0_26], %34 {strides = array<i32>} : memref<1x1x5x1xf32, #tpu.memory_space<vmem>>, vector<1x1x5x1xf32>,
    %c0_27 = arith.constant 0 : index
    %c0_28 = arith.constant 0 : index
    %c0_29 = arith.constant 0 : index
    %35 = vector.load %arg6[%c0_27, %c0_28, %c0_29] : memref<1x18x256xf32, #tpu.memory_space<vmem>>, vector<1x15x256xf32>
    %36 = vector.shape_cast %35 : vector<1x15x256xf32> to vector<15x256xf32>
    %c0_30 = arith.constant 0 : index
    %c3_31 = arith.constant 3 : index
    %c0_32 = arith.constant 0 : index
    %37 = vector.load %arg6[%c0_30, %c3_31, %c0_32] : memref<1x18x256xf32, #tpu.memory_space<vmem>>, vector<1x15x256xf32>
    %38 = vector.shape_cast %37 : vector<1x15x256xf32> to vector<15x256xf32>
    %39 = arith.subf %36, %38 : vector<15x256xf32>
    %40 = arith.mulf %39, %39 : vector<15x256xf32>
    %cst_33 = arith.constant dense<0.000000e+00> : vector<15xf32>
    %41 = vector.multi_reduction <add>, %40, %cst_33 [1] : vector<15x256xf32> to vector<15xf32>
    %42 = vector.shape_cast %41 : vector<15xf32> to vector<15x1xf32>
    %c0_34 = arith.constant 0 : index
    %c0_35 = arith.constant 0 : index
    %c0_36 = arith.constant 0 : index
    %c0_37 = arith.constant 0 : index
    %43 = vector.load %arg9[%c0_34, %c0_35, %c0_36, %c0_37] : memref<1x1x15x1xf32, #tpu.memory_space<vmem>>, vector<1x1x15x1xf32>
    %44 = vector.shape_cast %43 : vector<1x1x15x1xf32> to vector<15x1xf32>
    %45 = vector.shape_cast %42 : vector<15x1xf32> to vector<1x1x15x1xf32>
    tpu.vector_store %arg9[%c0_34, %c0_35, %c0_36, %c0_37], %45 {strides = array<i32>} : memref<1x1x15x1xf32, #tpu.memory_space<vmem>>, vector<1x1x15x1xf32>,
    return
  }
  func.func @transform_0(%arg0: i32, %arg1: i32) -> (i32, i32, i32) {
    %c0_i32 = arith.constant 0 : i32
    %c0_i32_0 = arith.constant 0 : i32
    return %arg0, %c0_i32, %arg1 : i32, i32, i32
  }
  func.func @transform_1(%arg0: i32, %arg1: i32) -> (i32, i32, i32) {
    %c0_i32 = arith.constant 0 : i32
    %c0_i32_0 = arith.constant 0 : i32
    return %arg0, %c0_i32, %arg1 : i32, i32, i32
  }
  func.func @transform_2(%arg0: i32, %arg1: i32) -> (i32, i32, i32) {
    %c0_i32 = arith.constant 0 : i32
    %c0_i32_0 = arith.constant 0 : i32
    return %arg0, %c0_i32, %arg1 : i32, i32, i32
  }
  func.func @transform_3(%arg0: i32, %arg1: i32) -> (i32, i32, i32) {
    %c0_i32 = arith.constant 0 : i32
    %c0_i32_0 = arith.constant 0 : i32
    return %arg0, %c0_i32, %arg1 : i32, i32, i32
  }
  func.func @transform_4(%arg0: i32, %arg1: i32) -> (i32, i32, i32) {
    %c0_i32 = arith.constant 0 : i32
    %c0_i32_0 = arith.constant 0 : i32
    return %arg0, %c0_i32, %arg1 : i32, i32, i32
  }
  func.func @transform_5(%arg0: i32, %arg1: i32) -> (i32, i32, i32, i32) {
    %c0_i32 = arith.constant 0 : i32
    %c0_i32_0 = arith.constant 0 : i32
    %c0_i32_1 = arith.constant 0 : i32
    return %arg0, %arg1, %c0_i32, %c0_i32_0 : i32, i32, i32, i32
  }
  func.func @transform_6(%arg0: i32, %arg1: i32) -> (i32, i32, i32, i32) {
    %c0_i32 = arith.constant 0 : i32
    %c0_i32_0 = arith.constant 0 : i32
    %c0_i32_1 = arith.constant 0 : i32
    return %arg0, %arg1, %c0_i32, %c0_i32_0 : i32, i32, i32, i32
  }
  func.func @transform_7(%arg0: i32, %arg1: i32) -> (i32, i32, i32, i32) {
    %c0_i32 = arith.constant 0 : i32
    %c0_i32_0 = arith.constant 0 : i32
    %c0_i32_1 = arith.constant 0 : i32
    return %arg0, %arg1, %c0_i32, %c0_i32_0 : i32, i32, i32, i32
  }
}

</mosaic_0001>

<llo_original>
// kernel: tpu_custom_call.1
$region0: #{tpu_custom_call.1}
  #allocation0 [shape = 'u32[]', space=smem, size = 0x4, offset = 0x4, fixed_abs, tag = 'smem constant byte address 0x4 - core index']
  #allocation1 [shape = 'u32[72,128]{1,0:T(1,128)}', space=vmem, size = 0x9000, scoped, tag = 'internal scratch']
  %s0 = inlined_call_operand.vmem [shape: f32[2,5,256], index: 0, kind: input, shape index: {}]
  %s1 = inlined_call_operand.vmem [shape: f32[2,3,256], index: 1, kind: input, shape index: {}]
  %s2 = inlined_call_operand.vmem [shape: f32[2,5,256], index: 2, kind: input, shape index: {}]
  %s3 = inlined_call_operand.vmem [shape: f32[2,8,256], index: 3, kind: input, shape index: {}]
  %s4 = inlined_call_operand.vmem [shape: f32[2,18,256], index: 4, kind: input, shape index: {}]
  %s5 = inlined_call_operand.vmem [shape: f32[2,1,1,1], index: 5, kind: output, shape index: {0}]
  %s6 = inlined_call_operand.vmem [shape: f32[2,1,5,1], index: 6, kind: output, shape index: {1}]
  %s7 = inlined_call_operand.vmem [shape: f32[2,1,15,1], index: 7, kind: output, shape index: {2}]
  %8 = xla_tuple %s5, %s6, %s7
  %s9 = sld [smem:[#allocation0]]
  $region69: #{tpu_custom_call.1} parent=0
    _
  %s11 = ssub.s32 1, %s9
  %s12 = scalar_select 0, %s11, %s9
  loop: start=0, step=1, limit=4
  $region2: #{tpu_custom_call.1} parent=0 // loop_pre_header
    _
  $region3: #{tpu_custom_call.1} parent=0 // loop_header
    %s14 = sphi 0, %s18
    %p15 = scmp.ge.s32.totalorder %s14, 4
    %s21 = sphi 0, %s33
    %s22 = sphi 0, %s29
    %s23 = sphi 0, %s21
    %s24 = sphi 0, %s22
    %s25 = sphi 0, %s23
    %s26 = sphi 0, %s24
    %s38 = sphi 0, %s40
    %s41 = sphi 0, %s38
    %s42 = sphi 0, %s41
    %s58 = sphi 0, %s42
    %s66 = sphi 0, %s68
    %s69 = sphi 0, %s66
    %s70 = sphi 0, %s69
    %s86 = sphi 0, %s70
    %s94 = sphi 0, %s96
    %s97 = sphi 0, %s94
    %s98 = sphi 0, %s97
    %s114 = sphi 0, %s98
    %s122 = sphi 0, %s124
    %s125 = sphi 0, %s122
    %s126 = sphi 0, %s125
    %s142 = sphi 0, %s126
    %s150 = sphi 0, %s152
    %s153 = sphi 0, %s150
    %s154 = sphi 0, %s153
    %s170 = sphi 0, %s154
    %s178 = sphi 0, %s180
    %s181 = sphi 0, %s178
    %s182 = sphi 0, %s181
    %s198 = sphi 0, %s182
    %s206 = sphi 0, %s208
    %s209 = sphi 0, %s206
    %s210 = sphi 0, %s209
    %s226 = sphi 0, %s210
    %s234 = sphi 0, %s236
    %s237 = sphi 0, %s234
    %s238 = sphi 0, %s237
    %s254 = sphi 0, %s238
  $region4: #{tpu_custom_call.1} parent=0 // loop_header_branch
    %17 = sbr.rel (%p15) target = $region8
  $region5: #{tpu_custom_call.1} parent=0 // loop_body
    %s19 = ssub.s32 %s14, 1
    %s20 = ssub.s32 %s14, 2
    %s27 = sadd.s32 1, %s22
    %p28 = scmp.ge.s32.totalorder %s27, 1
    %s29 = scalar_select %p28, 0, %s27
    %s30 = sadd.s32 1, %s21
    %s31 = scalar_select %p28, %s30, %s21
    %p32 = scmp.ge.s32.totalorder %s31, 2
    %s33 = scalar_select %p32, 0, %s31
    %s34 = ssub.s32 %s21, %s33
    %s35 = ssub.s32 %s22, %s29
    %s36 = sor.u32 %s34, %s35
    %p37 = scmp.eq.s32.totalorder %s36, 0
    %s39 = sadd.s32 %s38, 1
    %s40 = scalar_select %p37, %s38, %s39
    %p43 = pneg %p37
    %p44 = scmp.eq.s32.totalorder %s14, 1
    %p45 = por %p43, %p44
    %p46 = scmp.ne.s32.totalorder %s38, %s41
    %p47 = scmp.eq.s32.totalorder %s14, 0
    %p48 = por %p46, %p47
    %p49 = scmp.ne.s32.totalorder %s38, %s41
    %p50 = scmp.eq.s32.totalorder %s19, 1
    %p51 = por %p49, %p50
    %p52 = scmp.ne.s32.totalorder %s41, %s42
    %p53 = scmp.eq.s32.totalorder %s19, 0
    %p54 = por %p52, %p53
    %p55 = scmp.ne.s32.totalorder %s41, %s42
    %p56 = scmp.eq.s32.totalorder %s20, 1
    %p57 = por %p55, %p56
    %p59 = scmp.ne.s32.totalorder %s42, %s58
    %p60 = scmp.eq.s32.totalorder %s20, 0
    %p61 = por %p59, %p60
    %s62 = ssub.s32 %s21, %s33
    %s63 = ssub.s32 %s22, %s29
    %s64 = sor.u32 %s62, %s63
    %p65 = scmp.eq.s32.totalorder %s64, 0
    %s67 = sadd.s32 %s66, 1
    %s68 = scalar_select %p65, %s66, %s67
    %p71 = pneg %p65
    %p72 = scmp.eq.s32.totalorder %s14, 1
    %p73 = por %p71, %p72
    %p74 = scmp.ne.s32.totalorder %s66, %s69
    %p75 = scmp.eq.s32.totalorder %s14, 0
    %p76 = por %p74, %p75
    %p77 = scmp.ne.s32.totalorder %s66, %s69
    %p78 = scmp.eq.s32.totalorder %s19, 1
    %p79 = por %p77, %p78
    %p80 = scmp.ne.s32.totalorder %s69, %s70
    %p81 = scmp.eq.s32.totalorder %s19, 0
    %p82 = por %p80, %p81
    %p83 = scmp.ne.s32.totalorder %s69, %s70
    %p84 = scmp.eq.s32.totalorder %s20, 1
    %p85 = por %p83, %p84
    %p87 = scmp.ne.s32.totalorder %s70, %s86
    %p88 = scmp.eq.s32.totalorder %s20, 0
    %p89 = por %p87, %p88
    %s90 = ssub.s32 %s21, %s33
    %s91 = ssub.s32 %s22, %s29
    %s92 = sor.u32 %s90, %s91
    %p93 = scmp.eq.s32.totalorder %s92, 0
    %s95 = sadd.s32 %s94, 1
    %s96 = scalar_select %p93, %s94, %s95
    %p99 = pneg %p93
    %p100 = scmp.eq.s32.totalorder %s14, 1
    %p101 = por %p99, %p100
    %p102 = scmp.ne.s32.totalorder %s94, %s97
    %p103 = scmp.eq.s32.totalorder %s14, 0
    %p104 = por %p102, %p103
    %p105 = scmp.ne.s32.totalorder %s94, %s97
    %p106 = scmp.eq.s32.totalorder %s19, 1
    %p107 = por %p105, %p106
    %p108 = scmp.ne.s32.totalorder %s97, %s98
    %p109 = scmp.eq.s32.totalorder %s19, 0
    %p110 = por %p108, %p109
    %p111 = scmp.ne.s32.totalorder %s97, %s98
    %p112 = scmp.eq.s32.totalorder %s20, 1
    %p113 = por %p111, %p112
    %p115 = scmp.ne.s32.totalorder %s98, %s114
    %p116 = scmp.eq.s32.totalorder %s20, 0
    %p117 = por %p115, %p116
    %s118 = ssub.s32 %s21, %s33
    %s119 = ssub.s32 %s22, %s29
    %s120 = sor.u32 %s118, %s119
    %p121 = scmp.eq.s32.totalorder %s120, 0
    %s123 = sadd.s32 %s122, 1
    %s124 = scalar_select %p121, %s122, %s123
    %p127 = pneg %p121
    %p128 = scmp.eq.s32.totalorder %s14, 1
    %p129 = por %p127, %p128
    %p130 = scmp.ne.s32.totalorder %s122, %s125
    %p131 = scmp.eq.s32.totalorder %s14, 0
    %p132 = por %p130, %p131
    %p133 = scmp.ne.s32.totalorder %s122, %s125
    %p134 = scmp.eq.s32.totalorder %s19, 1
    %p135 = por %p133, %p134
    %p136 = scmp.ne.s32.totalorder %s125, %s126
    %p137 = scmp.eq.s32.totalorder %s19, 0
    %p138 = por %p136, %p137
    %p139 = scmp.ne.s32.totalorder %s125, %s126
    %p140 = scmp.eq.s32.totalorder %s20, 1
    %p141 = por %p139, %p140
    %p143 = scmp.ne.s32.totalorder %s126, %s142
    %p144 = scmp.eq.s32.totalorder %s20, 0
    %p145 = por %p143, %p144
    %s146 = ssub.s32 %s21, %s33
    %s147 = ssub.s32 %s22, %s29
    %s148 = sor.u32 %s146, %s147
    %p149 = scmp.eq.s32.totalorder %s148, 0
    %s151 = sadd.s32 %s150, 1
    %s152 = scalar_select %p149, %s150, %s151
    %p155 = pneg %p149
    %p156 = scmp.eq.s32.totalorder %s14, 1
    %p157 = por %p155, %p156
    %p158 = scmp.ne.s32.totalorder %s150, %s153
    %p159 = scmp.eq.s32.totalorder %s14, 0
    %p160 = por %p158, %p159
    %p161 = scmp.ne.s32.totalorder %s150, %s153
    %p162 = scmp.eq.s32.totalorder %s19, 1
    %p163 = por %p161, %p162
    %p164 = scmp.ne.s32.totalorder %s153, %s154
    %p165 = scmp.eq.s32.totalorder %s19, 0
    %p166 = por %p164, %p165
    %p167 = scmp.ne.s32.totalorder %s153, %s154
    %p168 = scmp.eq.s32.totalorder %s20, 1
    %p169 = por %p167, %p168
    %p171 = scmp.ne.s32.totalorder %s154, %s170
    %p172 = scmp.eq.s32.totalorder %s20, 0
    %p173 = por %p171, %p172
    %s174 = ssub.s32 %s21, %s33
    %s175 = ssub.s32 %s22, %s29
    %s176 = sor.u32 %s174, %s175
    %p177 = scmp.eq.s32.totalorder %s176, 0
    %s179 = sadd.s32 %s178, 1
    %s180 = scalar_select %p177, %s178, %s179
    %p183 = pneg %p177
    %p184 = scmp.eq.s32.totalorder %s14, 1
    %p185 = por %p183, %p184
    %p186 = scmp.ne.s32.totalorder %s178, %s181
    %p187 = scmp.eq.s32.totalorder %s14, 0
    %p188 = por %p186, %p187
    %p189 = scmp.ne.s32.totalorder %s178, %s181
    %p190 = scmp.eq.s32.totalorder %s19, 1
    %p191 = por %p189, %p190
    %p192 = scmp.ne.s32.totalorder %s181, %s182
    %p193 = scmp.eq.s32.totalorder %s19, 0
    %p194 = por %p192, %p193
    %p195 = scmp.ne.s32.totalorder %s181, %s182
    %p196 = scmp.eq.s32.totalorder %s20, 1
    %p197 = por %p195, %p196
    %p199 = scmp.ne.s32.totalorder %s182, %s198
    %p200 = scmp.eq.s32.totalorder %s20, 0
    %p201 = por %p199, %p200
    %s202 = ssub.s32 %s21, %s33
    %s203 = ssub.s32 %s22, %s29
    %s204 = sor.u32 %s202, %s203
    %p205 = scmp.eq.s32.totalorder %s204, 0
    %s207 = sadd.s32 %s206, 1
    %s208 = scalar_select %p205, %s206, %s207
    %p211 = pneg %p205
    %p212 = scmp.eq.s32.totalorder %s14, 1
    %p213 = por %p211, %p212
    %p214 = scmp.ne.s32.totalorder %s206, %s209
    %p215 = scmp.eq.s32.totalorder %s14, 0
    %p216 = por %p214, %p215
    %p217 = scmp.ne.s32.totalorder %s206, %s209
    %p218 = scmp.eq.s32.totalorder %s19, 1
    %p219 = por %p217, %p218
    %p220 = scmp.ne.s32.totalorder %s209, %s210
    %p221 = scmp.eq.s32.totalorder %s19, 0
    %p222 = por %p220, %p221
    %p223 = scmp.ne.s32.totalorder %s209, %s210
    %p224 = scmp.eq.s32.totalorder %s20, 1
    %p225 = por %p223, %p224
    %p227 = scmp.ne.s32.totalorder %s210, %s226
    %p228 = scmp.eq.s32.totalorder %s20, 0
    %p229 = por %p227, %p228
    %s230 = ssub.s32 %s21, %s33
    %s231 = ssub.s32 %s22, %s29
    %s232 = sor.u32 %s230, %s231
    %p233 = scmp.eq.s32.totalorder %s232, 0
    %s235 = sadd.s32 %s234, 1
    %s236 = scalar_select %p233, %s234, %s235
    %p239 = pneg %p233
    %p240 = scmp.eq.s32.totalorder %s14, 1
    %p241 = por %p239, %p240
    %p242 = scmp.ne.s32.totalorder %s234, %s237
    %p243 = scmp.eq.s32.totalorder %s14, 0
    %p244 = por %p242, %p243
    %p245 = scmp.ne.s32.totalorder %s234, %s237
    %p246 = scmp.eq.s32.totalorder %s19, 1
    %p247 = por %p245, %p246
    %p248 = scmp.ne.s32.totalorder %s237, %s238
    %p249 = scmp.eq.s32.totalorder %s19, 0
    %p250 = por %p248, %p249
    %p251 = scmp.ne.s32.totalorder %s237, %s238
    %p252 = scmp.eq.s32.totalorder %s20, 1
    %p253 = por %p251, %p252
    %p255 = scmp.ne.s32.totalorder %s238, %s254
    %p256 = scmp.eq.s32.totalorder %s20, 0
    %p257 = por %p255, %p256
    %p258 = scmp.le.s32.totalorder 1, %s14
    %p259 = scmp.lt.s32.totalorder %s14, 3
    %p260 = pnand %p258, %p259
    %p261 = pneg %p260
    // Predicated region
    $region9: #{tpu_custom_call.1} parent=5 // pred_check
      _
    $region10: #{tpu_custom_call.1} parent=5 // pred_check_branch
      %263 = sbr.rel (%p260) target = $region12
    $region11: #{tpu_custom_call.1} parent=5 // pred_region
      %s264 = ssub.s32 %s14, 1
    $region12: #{tpu_custom_call.1} parent=5 // pred_fallthru
      _
    %p265 = scmp.lt.s32.totalorder %s14, 2
    // Predicated region
    $region13: #{tpu_custom_call.1} parent=5 // pred_check
      %p266 = pneg %p265
    $region14: #{tpu_custom_call.1} parent=5 // pred_check_branch
      %268 = sbr.rel (%p266) target = $region16
    $region15: #{tpu_custom_call.1} parent=5 // pred_region
      // Predicated region
      $region17: #{tpu_custom_call.1} parent=15 // pred_check
        %p269 = pneg %p48
      $region18: #{tpu_custom_call.1} parent=15 // pred_check_branch
        %271 = sbr.rel (%p269) target = $region20
      $region19: #{tpu_custom_call.1} parent=15 // pred_region
        %s272 = smul.u32 2, %s22
        %p273 = scmp.lt.s32.totalorder %s21, 1
        %s274 = scalar_select %p273, %s21, 1
        %p275 = scmp.lt.s32.totalorder %s272, 1
        %s276 = scalar_select %p275, %s272, 1
        %s277 = smul.addr %s274, 2
        %s278 = sadd.s32 %s276, %s277
        %s279 = smul.addr %s278, 8
        %s280 = scalar_lea.vmem %s0, %s279
        %s281 = smul.u32 2, %s22
      $region20: #{tpu_custom_call.1} parent=15 // pred_fallthru
        _
      // Predicated region
      $region21: #{tpu_custom_call.1} parent=15 // pred_check
        %p282 = pneg %p76
      $region22: #{tpu_custom_call.1} parent=15 // pred_check_branch
        %284 = sbr.rel (%p282) target = $region24
      $region23: #{tpu_custom_call.1} parent=15 // pred_region
        %s285 = smul.u32 2, %s22
        %p286 = scmp.lt.s32.totalorder %s21, 1
        %s287 = scalar_select %p286, %s21, 1
        %p288 = scmp.lt.s32.totalorder %s285, 1
        %s289 = scalar_select %p288, %s285, 1
        %s290 = smul.addr %s287, 2
        %s291 = sadd.s32 %s289, %s290
        %s292 = smul.addr %s291, 4
        %s293 = scalar_lea.vmem %s1, %s292
        %s294 = smul.u32 2, %s22
      $region24: #{tpu_custom_call.1} parent=15 // pred_fallthru
        _
      // Predicated region
      $region25: #{tpu_custom_call.1} parent=15 // pred_check
        %p295 = pneg %p104
      $region26: #{tpu_custom_call.1} parent=15 // pred_check_branch
        %297 = sbr.rel (%p295) target = $region28
      $region27: #{tpu_custom_call.1} parent=15 // pred_region
        %s298 = smul.u32 2, %s22
        %p299 = scmp.lt.s32.totalorder %s21, 1
        %s300 = scalar_select %p299, %s21, 1
        %p301 = scmp.lt.s32.totalorder %s298, 1
        %s302 = scalar_select %p301, %s298, 1
        %s303 = smul.addr %s300, 2
        %s304 = sadd.s32 %s302, %s303
        %s305 = smul.addr %s304, 8
        %s306 = scalar_lea.vmem %s2, %s305
        %s307 = smul.u32 2, %s22
      $region28: #{tpu_custom_call.1} parent=15 // pred_fallthru
        _
      // Predicated region
      $region29: #{tpu_custom_call.1} parent=15 // pred_check
        %p308 = pneg %p132
      $region30: #{tpu_custom_call.1} parent=15 // pred_check_branch
        %310 = sbr.rel (%p308) target = $region32
      $region31: #{tpu_custom_call.1} parent=15 // pred_region
        %s311 = smul.u32 2, %s22
        %p312 = scmp.lt.s32.totalorder %s21, 1
        %s313 = scalar_select %p312, %s21, 1
        %p314 = scmp.lt.s32.totalorder %s311, 1
        %s315 = scalar_select %p314, %s311, 1
        %s316 = smul.addr %s313, 2
        %s317 = sadd.s32 %s315, %s316
        %s318 = smul.addr %s317, 8
        %s319 = scalar_lea.vmem %s3, %s318
        %s320 = smul.u32 2, %s22
      $region32: #{tpu_custom_call.1} parent=15 // pred_fallthru
        _
      // Predicated region
      $region33: #{tpu_custom_call.1} parent=15 // pred_check
        %p321 = pneg %p160
      $region34: #{tpu_custom_call.1} parent=15 // pred_check_branch
        %323 = sbr.rel (%p321) target = $region36
      $region35: #{tpu_custom_call.1} parent=15 // pred_region
        %s324 = smul.u32 2, %s22
        %p325 = scmp.lt.s32.totalorder %s21, 1
        %s326 = scalar_select %p325, %s21, 1
        %p327 = scmp.lt.s32.totalorder %s324, 1
        %s328 = scalar_select %p327, %s324, 1
        %s329 = smul.addr %s326, 6
        %s330 = sadd.s32 %s328, %s329
        %s331 = smul.addr %s330, 8
        %s332 = scalar_lea.vmem %s4, %s331
        %s333 = smul.u32 2, %s22
      $region36: #{tpu_custom_call.1} parent=15 // pred_fallthru
        _
    $region16: #{tpu_custom_call.1} parent=5 // pred_fallthru
      _
    %p334 = scmp.le.s32.totalorder 1, %s14
    %p335 = scmp.lt.s32.totalorder %s14, 3
    %p336 = pnand %p334, %p335
    %p337 = pneg %p336
    // Predicated region
    $region37: #{tpu_custom_call.1} parent=5 // pred_check
      _
    $region38: #{tpu_custom_call.1} parent=5 // pred_check_branch
      %339 = sbr.rel (%p336) target = $region40
    $region39: #{tpu_custom_call.1} parent=5 // pred_region
      %s340 = ssub.s32 %s14, 1
      %s341 = smul.u32 2, %s24
      %p342 = scmp.lt.s32.totalorder %s23, 1
      %s343 = scalar_select %p342, %s23, 1
      %p344 = scmp.lt.s32.totalorder %s341, 1
      %s345 = scalar_select %p344, %s341, 1
      %s346 = smul.addr %s343, 2
      %s347 = sadd.s32 %s345, %s346
      %s348 = smul.addr %s347, 8
      %s349 = scalar_lea.vmem %s0, %s348
      %p350 = pneg %p54
      %p351 = pneg %p51
      %s352 = smul.u32 2, %s24
      %p353 = scmp.lt.s32.totalorder %s23, 1
      %s354 = scalar_select %p353, %s23, 1
      %p355 = scmp.lt.s32.totalorder %s352, 1
      %s356 = scalar_select %p355, %s352, 1
      %s357 = smul.addr %s354, 2
      %s358 = sadd.s32 %s356, %s357
      %s359 = smul.addr %s358, 4
      %s360 = scalar_lea.vmem %s1, %s359
      %p361 = pneg %p82
      %p362 = pneg %p79
      %s363 = smul.u32 2, %s24
      %p364 = scmp.lt.s32.totalorder %s23, 1
      %s365 = scalar_select %p364, %s23, 1
      %p366 = scmp.lt.s32.totalorder %s363, 1
      %s367 = scalar_select %p366, %s363, 1
      %s368 = smul.addr %s365, 2
      %s369 = sadd.s32 %s367, %s368
      %s370 = smul.addr %s369, 8
      %s371 = scalar_lea.vmem %s2, %s370
      %p372 = pneg %p110
      %p373 = pneg %p107
      %s374 = smul.u32 2, %s24
      %p375 = scmp.lt.s32.totalorder %s23, 1
      %s376 = scalar_select %p375, %s23, 1
      %p377 = scmp.lt.s32.totalorder %s374, 1
      %s378 = scalar_select %p377, %s374, 1
      %s379 = smul.addr %s376, 2
      %s380 = sadd.s32 %s378, %s379
      %s381 = smul.addr %s380, 8
      %s382 = scalar_lea.vmem %s3, %s381
      %p383 = pneg %p138
      %p384 = pneg %p135
      %s385 = smul.u32 2, %s24
      %p386 = scmp.lt.s32.totalorder %s23, 1
      %s387 = scalar_select %p386, %s23, 1
      %p388 = scmp.lt.s32.totalorder %s385, 1
      %s389 = scalar_select %p388, %s385, 1
      %s390 = smul.addr %s387, 6
      %s391 = sadd.s32 %s389, %s390
      %s392 = smul.addr %s391, 8
      %s393 = scalar_lea.vmem %s4, %s392
      %p394 = pneg %p166
      %p395 = pneg %p163
      %p396 = pneg %p194
      %p397 = pneg %p191
      %p398 = scmp.lt.s32.totalorder %s23, 1
      %s399 = scalar_select %p398, %s23, 1
      %p400 = scmp.lt.s32.totalorder %s24, 0
      %s401 = scalar_select %p400, %s24, 0
      %s402 = sadd.s32 %s401, %s399
      %s403 = scalar_lea.vmem %s5, %s402
      %p404 = pneg %p222
      %p405 = pneg %p219
      %p406 = scmp.lt.s32.totalorder %s23, 1
      %s407 = scalar_select %p406, %s23, 1
      %p408 = scmp.lt.s32.totalorder %s24, 0
      %s409 = scalar_select %p408, %s24, 0
      %s410 = sadd.s32 %s409, %s407
      %s411 = smul.addr %s410, 8
      %s412 = scalar_lea.vmem %s6, %s411
      %p413 = pneg %p250
      %p414 = pneg %p247
      %p415 = scmp.lt.s32.totalorder %s23, 1
      %s416 = scalar_select %p415, %s23, 1
      %p417 = scmp.lt.s32.totalorder %s24, 0
      %s418 = scalar_select %p417, %s24, 0
      %s419 = smul.addr %s418, 2
      %s420 = smul.addr %s416, 2
      %s421 = sadd.s32 %s419, %s420
      %s422 = smul.addr %s421, 8
      %s423 = scalar_lea.vmem %s7, %s422
      %s424 = smul.u32 2, %s24
      %p425 = scmp.lt.s32.totalorder %s23, 1
      %s426 = scalar_select %p425, %s23, 1
      %p427 = scmp.lt.s32.totalorder %s424, 1
      %s428 = scalar_select %p427, %s424, 1
      %s429 = smul.addr %s426, 2
      %s430 = sadd.s32 %s428, %s429
      %s431 = smul.addr %s430, 8
      %s432 = scalar_lea.vmem %s0, %s431
      %s433 = smul.u32 2, %s24
      %s434 = smul.u32 2, %s24
      %p435 = scmp.lt.s32.totalorder %s23, 1
      %s436 = scalar_select %p435, %s23, 1
      %p437 = scmp.lt.s32.totalorder %s434, 1
      %s438 = scalar_select %p437, %s434, 1
      %s439 = smul.addr %s436, 2
      %s440 = sadd.s32 %s438, %s439
      %s441 = smul.addr %s440, 4
      %s442 = scalar_lea.vmem %s1, %s441
      %s443 = smul.u32 2, %s24
      %s444 = smul.u32 2, %s24
      %p445 = scmp.lt.s32.totalorder %s23, 1
      %s446 = scalar_select %p445, %s23, 1
      %p447 = scmp.lt.s32.totalorder %s444, 1
      %s448 = scalar_select %p447, %s444, 1
      %s449 = smul.addr %s446, 2
      %s450 = sadd.s32 %s448, %s449
      %s451 = smul.addr %s450, 8
      %s452 = scalar_lea.vmem %s2, %s451
      %s453 = smul.u32 2, %s24
      %s454 = smul.u32 2, %s24
      %p455 = scmp.lt.s32.totalorder %s23, 1
      %s456 = scalar_select %p455, %s23, 1
      %p457 = scmp.lt.s32.totalorder %s454, 1
      %s458 = scalar_select %p457, %s454, 1
      %s459 = smul.addr %s456, 2
      %s460 = sadd.s32 %s458, %s459
      %s461 = smul.addr %s460, 8
      %s462 = scalar_lea.vmem %s3, %s461
      %s463 = smul.u32 2, %s24
      %s464 = smul.u32 2, %s24
      %p465 = scmp.lt.s32.totalorder %s23, 1
      %s466 = scalar_select %p465, %s23, 1
      %p467 = scmp.lt.s32.totalorder %s464, 1
      %s468 = scalar_select %p467, %s464, 1
      %s469 = smul.addr %s466, 6
      %s470 = sadd.s32 %s468, %s469
      %s471 = smul.addr %s470, 8
      %s472 = scalar_lea.vmem %s4, %s471
      %s473 = smul.u32 2, %s24
      %p474 = scmp.lt.s32.totalorder %s23, 1
      %s475 = scalar_select %p474, %s23, 1
      %p476 = scmp.lt.s32.totalorder %s24, 0
      %s477 = scalar_select %p476, %s24, 0
      %s478 = sadd.s32 %s477, %s475
      %s479 = scalar_lea.vmem %s5, %s478
      %p480 = scmp.lt.s32.totalorder %s23, 1
      %s481 = scalar_select %p480, %s23, 1
      %p482 = scmp.lt.s32.totalorder %s24, 0
      %s483 = scalar_select %p482, %s24, 0
      %s484 = sadd.s32 %s483, %s481
      %s485 = smul.addr %s484, 8
      %s486 = scalar_lea.vmem %s6, %s485
      %p487 = scmp.lt.s32.totalorder %s23, 1
      %s488 = scalar_select %p487, %s23, 1
      %p489 = scmp.lt.s32.totalorder %s24, 0
      %s490 = scalar_select %p489, %s24, 0
      %s491 = smul.addr %s490, 2
      %s492 = smul.addr %s488, 2
      %s493 = sadd.s32 %s491, %s492
      %s494 = smul.addr %s493, 8
      %s495 = scalar_lea.vmem %s7, %s494
      %v496 = vld [vmem:[%s432] sm:$0x1f]
      %v497 = vld [vmem:[%s432 + $0x8] sm:$0x1f]
      %v498 = vld [vmem:[%s462] sm:$0x1f]
      %v499 = vld [vmem:[%s462 + $0x8] sm:$0x1f]
      %v500 = vsub.f32 %v496, %v498
      %v501 = vsub.f32 %v497, %v499
      %v502 = vld [vmem:[%s442] sm:$0x77]
      %v503 = vld [vmem:[%s462] sm:$0xe0]
      %v504 = vld [vmem:[%s462 + $0x8] sm:$0xe0]
      %507 = vst.sshfl [vmem:[#allocation1] sm:$0xff pattern:$0x75316420] %v503
      %508 = vst.sshfl [vmem:[#allocation1 + $0x8] sm:$0xff pattern:$0x75316420] %v504
      %s509 = scalar_lea.vmem [#allocation1], 1
      %v510 = vld [vmem:[%s509] ss:$2 sm:$0xff]
      %v511 = vrot.slane %v510, 5
      %v512 = vrot.slane %v511, 4
      %v514 = vsub.f32 %v502, %v512
      %v515 = vmul.f32 %v500, %v500
      %v516 = vmul.f32 %v501, %v501
      %vm517 = vcmask 1044480
      %v518 = vsel %vm517, %v515, 0.0
      %v519 = vsel %vm517, %v516, 0.0
      %v520 = vadd.f32 %v518, %v519
      %521 = vadd.xlane.f32.xlu0 %v520
      %v522 = vpop.xlane.xlu0 %521
      %v523 = vmul.f32 %v514, %v514
      %525 = vst [vmem:[#allocation1] ss:$2 sm:$0xff] %v523
      %v526 = vld.sshfl [vmem:[#allocation1] sm:$0xff pattern:$0x75316420]
      %v527 = vld.sshfl [vmem:[#allocation1 + $0x8] sm:$0xff pattern:$0x75316420]
      %vm530 = vcmask 1042432
      %v531 = vsel %vm530, %v526, 0.0
      %v532 = vsel %vm530, %v527, 0.0
      %v533 = vadd.f32 %v531, %v532
      %534 = vadd.xlane.f32.xlu0 %v533
      %v535 = vpop.xlane.xlu0 %534
      %v536 = vsel %vm517, %v522, 0.0
      %v537 = vrot.slane %v536, 4
      %v538 = vadd.f32 %v536, %v537
      %v539 = vrot.slane %v538, 2
      %v540 = vadd.f32 %v538, %v539
      %v541 = vrot.slane %v540, 1
      %v542 = vadd.f32 %v540, %v541
      %v543 = vsel %vm530, %v535, 0.0
      %v544 = vrot.slane %v543, 4
      %v545 = vadd.f32 %v543, %v544
      %v546 = vrot.slane %v545, 2
      %v547 = vadd.f32 %v545, %v546
      %v548 = vrot.slane %v547, 1
      %v549 = vadd.f32 %v547, %v548
      %v550 = vadd.f32 %v542, %v549
      %vm551 = vcmask 0
      %552 = vst.msk [vmem:[%s479] sm:$0x1] %vm551, %v550
      %v553 = vld [vmem:[%s452] sm:$0x1f]
      %v554 = vld [vmem:[%s452 + $0x8] sm:$0x1f]
      %v555 = vld [vmem:[%s462] sm:$0xf8]
      %v556 = vld [vmem:[%s462 + $0x8] sm:$0xf8]
      %v559 = vrot.slane %v555, 3
      %v560 = vrot.slane %v556, 3
      %v563 = vsub.f32 %v553, %v559
      %v564 = vsub.f32 %v554, %v560
      %v565 = vmul.f32 %v563, %v563
      %v566 = vmul.f32 %v564, %v564
      %v567 = vsel %vm517, %v565, 0.0
      %v568 = vsel %vm517, %v566, 0.0
      %v569 = vadd.f32 %v567, %v568
      %570 = vadd.xlane.f32.xlu0 %v569
      %v571 = vpop.xlane.xlu0 %570
      %vm572 = vcmask 4096
      %573 = vst.msk [vmem:[%s486] sm:$0x1f] %vm572, %v571
      %v574 = vld [vmem:[%s472] sm:$0xff]
      %v575 = vld [vmem:[%s472 + $0x8] sm:$0xff]
      %v576 = vld [vmem:[%s472 + $0x10] sm:$0x7f]
      %v577 = vld [vmem:[%s472 + $0x18] sm:$0x7f]
      %v578 = vld [vmem:[%s472] sm:$0xf8]
      %v579 = vld [vmem:[%s472 + $0x8] sm:$0xf8]
      %v580 = vld [vmem:[%s472 + $0x10] sm:$0xff]
      %v581 = vld [vmem:[%s472 + $0x18] sm:$0xff]
      %v582 = vld [vmem:[%s472 + $0x20] sm:$0x3]
      %v583 = vld [vmem:[%s472 + $0x28] sm:$0x3]
      %v590 = vrot.slane %v578, 3
      %v591 = vrot.slane %v580, 3
      %v592 = vsel %vm517, %v590, %v591
      %v593 = vrot.slane %v579, 3
      %v594 = vrot.slane %v581, 3
      %v595 = vsel %vm517, %v593, %v594
      %v596 = vrot.slane %v582, 3
      %v597 = vsel %vm517, %v591, %v596
      %v598 = vrot.slane %v583, 3
      %v599 = vsel %vm517, %v594, %v598
      %v604 = vsub.f32 %v574, %v592
      %v605 = vsub.f32 %v575, %v595
      %v606 = vsub.f32 %v576, %v597
      %v607 = vsub.f32 %v577, %v599
      %v608 = vmul.f32 %v604, %v604
      %v609 = vmul.f32 %v605, %v605
      %v610 = vmul.f32 %v606, %v606
      %v611 = vmul.f32 %v607, %v607
      %v612 = vadd.f32 %v608, %v609
      %613 = vadd.xlane.f32.xlu0 %v612
      %v614 = vpop.xlane.xlu0 %613
      %vm615 = vcmask 1046528
      %v616 = vsel %vm615, %v610, 0.0
      %v617 = vsel %vm615, %v611, 0.0
      %v618 = vadd.f32 %v616, %v617
      %619 = vadd.xlane.f32.xlu0 %v618
      %v620 = vpop.xlane.xlu0 %619
      %vm621 = vcmask 7168
      %622 = vst.msk [vmem:[%s495] sm:$0xff] %vm621, %v614
      %vm623 = vcmask 6144
      %624 = vst.msk [vmem:[%s495 + $0x8] sm:$0x7f] %vm623, %v620
      %p625 = scmp.lt.s32.totalorder %s23, 1
      %s626 = scalar_select %p625, %s23, 1
      %p627 = scmp.lt.s32.totalorder %s24, 0
      %s628 = scalar_select %p627, %s24, 0
      %s629 = sadd.s32 %s628, %s626
      %s630 = scalar_lea.vmem %s5, %s629
      %p631 = scmp.lt.s32.totalorder %s23, 1
      %s632 = scalar_select %p631, %s23, 1
      %p633 = scmp.lt.s32.totalorder %s24, 0
      %s634 = scalar_select %p633, %s24, 0
      %s635 = sadd.s32 %s634, %s632
      %s636 = smul.addr %s635, 8
      %s637 = scalar_lea.vmem %s6, %s636
      %p638 = scmp.lt.s32.totalorder %s23, 1
      %s639 = scalar_select %p638, %s23, 1
      %p640 = scmp.lt.s32.totalorder %s24, 0
      %s641 = scalar_select %p640, %s24, 0
      %s642 = smul.addr %s641, 2
      %s643 = smul.addr %s639, 2
      %s644 = sadd.s32 %s642, %s643
      %s645 = smul.addr %s644, 8
      %s646 = scalar_lea.vmem %s7, %s645
      // Predicated region
      $region41: #{tpu_custom_call.1} parent=39 // pred_check
        %p647 = pneg %p191
      $region42: #{tpu_custom_call.1} parent=39 // pred_check_branch
        %649 = sbr.rel (%p647) target = $region44
      $region43: #{tpu_custom_call.1} parent=39 // pred_region
        _
      $region44: #{tpu_custom_call.1} parent=39 // pred_fallthru
        _
      // Predicated region
      $region45: #{tpu_custom_call.1} parent=39 // pred_check
        %p650 = pneg %p219
      $region46: #{tpu_custom_call.1} parent=39 // pred_check_branch
        %652 = sbr.rel (%p650) target = $region48
      $region47: #{tpu_custom_call.1} parent=39 // pred_region
        _
      $region48: #{tpu_custom_call.1} parent=39 // pred_fallthru
        _
      // Predicated region
      $region49: #{tpu_custom_call.1} parent=39 // pred_check
        %p653 = pneg %p247
      $region50: #{tpu_custom_call.1} parent=39 // pred_check_branch
        %655 = sbr.rel (%p653) target = $region52
      $region51: #{tpu_custom_call.1} parent=39 // pred_region
        _
      $region52: #{tpu_custom_call.1} parent=39 // pred_fallthru
        _
    $region40: #{tpu_custom_call.1} parent=5 // pred_fallthru
      _
    %p656 = scmp.le.s32.totalorder 2, %s14
    // Predicated region
    $region53: #{tpu_custom_call.1} parent=5 // pred_check
      %p657 = pneg %p656
    $region54: #{tpu_custom_call.1} parent=5 // pred_check_branch
      %659 = sbr.rel (%p657) target = $region56
    $region55: #{tpu_custom_call.1} parent=5 // pred_region
      %s660 = ssub.s32 %s14, 2
      // Predicated region
      $region57: #{tpu_custom_call.1} parent=55 // pred_check
        %p661 = pneg %p197
      $region58: #{tpu_custom_call.1} parent=55 // pred_check_branch
        %663 = sbr.rel (%p661) target = $region60
      $region59: #{tpu_custom_call.1} parent=55 // pred_region
        %p664 = scmp.lt.s32.totalorder %s25, 1
        %s665 = scalar_select %p664, %s25, 1
        %p666 = scmp.lt.s32.totalorder %s26, 0
        %s667 = scalar_select %p666, %s26, 0
        %s668 = sadd.s32 %s667, %s665
        %s669 = scalar_lea.vmem %s5, %s668
      $region60: #{tpu_custom_call.1} parent=55 // pred_fallthru
        _
      // Predicated region
      $region61: #{tpu_custom_call.1} parent=55 // pred_check
        %p670 = pneg %p225
      $region62: #{tpu_custom_call.1} parent=55 // pred_check_branch
        %672 = sbr.rel (%p670) target = $region64
      $region63: #{tpu_custom_call.1} parent=55 // pred_region
        %p673 = scmp.lt.s32.totalorder %s25, 1
        %s674 = scalar_select %p673, %s25, 1
        %p675 = scmp.lt.s32.totalorder %s26, 0
        %s676 = scalar_select %p675, %s26, 0
        %s677 = sadd.s32 %s676, %s674
        %s678 = smul.addr %s677, 8
        %s679 = scalar_lea.vmem %s6, %s678
      $region64: #{tpu_custom_call.1} parent=55 // pred_fallthru
        _
      // Predicated region
      $region65: #{tpu_custom_call.1} parent=55 // pred_check
        %p680 = pneg %p253
      $region66: #{tpu_custom_call.1} parent=55 // pred_check_branch
        %682 = sbr.rel (%p680) target = $region68
      $region67: #{tpu_custom_call.1} parent=55 // pred_region
        %p683 = scmp.lt.s32.totalorder %s25, 1
        %s684 = scalar_select %p683, %s25, 1
        %p685 = scmp.lt.s32.totalorder %s26, 0
        %s686 = scalar_select %p685, %s26, 0
        %s687 = smul.addr %s686, 2
        %s688 = smul.addr %s684, 2
        %s689 = sadd.s32 %s687, %s688
        %s690 = smul.addr %s689, 8
        %s691 = scalar_lea.vmem %s7, %s690
      $region68: #{tpu_custom_call.1} parent=55 // pred_fallthru
        _
    $region56: #{tpu_custom_call.1} parent=5 // pred_fallthru
      _
  $region6: #{tpu_custom_call.1} parent=0 // loop_footer
    %s18 = sadd.s32 1, %s14
  $region7: #{tpu_custom_call.1} parent=0 // loop_footer_branch
    %13 = sbr.rel target = $region3
  $region8: #{tpu_custom_call.1} parent=0 // loop_exit
    _

</llo_original>
